<compile_context>
chip_gen: v6e
topology: v6e:2x2x1
jax: 0.10.0
libtpu: 0.0.40
codegen_flags: <defaults>
</compile_context>

<pallas_src>
import jax
import jax.numpy as jnp
import numpy as np
from jax.experimental import pallas as pl
from jax.experimental.pallas import tpu as pltpu


def _attention_kernel(enc_ref, dproj_ref, wenc_ref, out_ref):
    # enc_ref   : (S, Bt, De)  encoder outputs (seq-first) for this batch tile
    # dproj_ref : (Bt, A)      precomputed  decoder_hidden @ W_dec + bias
    # wenc_ref  : (De, A)      weight slice applied to the encoder outputs
    # out_ref   : (Bt, S)      softmax attention weights
    S, Bt, De = enc_ref.shape

    # Fold the source-length axis into the matmul M dimension: one big
    # (S*Bt, De) @ (De, A) MXU matmul instead of S skinny (Bt, De) ones.
    # Bt is always a multiple of 8, so collapsing (S, Bt, De) -> (S*Bt, De)
    # is tile-aligned (pure vreg re-stacking, no lane data movement).
    enc_flat = enc_ref[...].reshape(S * Bt, De)
    pre = jnp.dot(enc_flat, wenc_ref[...],
                  preferred_element_type=jnp.float32)               # (S*Bt, A)

    dproj = dproj_ref[...]                                          # (Bt, A)
    cols = []
    for s in range(S):  # static unroll; sublane-aligned slices (s*Bt % 8 == 0)
        energy = jnp.tanh(pre[s * Bt:(s + 1) * Bt, :] + dproj)      # (Bt, A)
        cols.append(jnp.sum(energy, axis=-1, keepdims=True))        # (Bt, 1)
    att = jnp.concatenate(cols, axis=-1)                            # (Bt, S)

    # Softmax over the source-length axis (lanes), max-subtracted.
    m = jnp.max(att, axis=-1, keepdims=True)
    e = jnp.exp(att - m)
    denom = jnp.sum(e, axis=-1, keepdims=True)
    out_ref[...] = e * pl.reciprocal(denom, approx=True)


def _choose_batch_tile(B, S, De, A):
    """Largest 8-aligned batch tile whose per-step VMEM footprint (double
    buffered encoder block + in-kernel (S*Bt, A) f32 intermediates) stays well
    under the scoped-VMEM budget on every TPU generation (v5e/v6e/v7x)."""
    bytes_per_row = 4 * S * (2 * De + 3 * A) + 4 * (2 * A + 2 * S)
    budget = 12 * 1024 * 1024
    bt = (budget // max(bytes_per_row, 1)) // 8 * 8
    bt = int(max(8, min(bt, 256)))            # cap: keeps grid parallelism
    b8 = ((B + 7) // 8) * 8
    return min(bt, b8)
    # TODO(synk): for extremely long source sequences the (S, Bt, De) block may
    # still exceed VMEM at Bt=8; that case needs an online-softmax tiling of S.


def attention_forward(decoder_hidden, encoder_outputs, W, b,
                      enc_hid_dim, dec_hid_dim, *, block_b=None):
    """decoder_hidden: [B, Dd], encoder_outputs: [S, B, 2*enc_hid_dim] (seq-first),
       W: [attn_in, attn_dim] (pre-transposed vs torch; concat order (dec, enc)),
       b: [attn_dim].  Returns softmax attention weights [B, S] float32."""
    S, B, De = encoder_outputs.shape
    Dd = decoder_hidden.shape[1]
    A = W.shape[1]
    assert De == 2 * enc_hid_dim and Dd == dec_hid_dim

    # Split the concat Linear:  concat([dec, enc]) @ W == dec @ W_dec + enc @ W_enc
    W_dec = W[:Dd, :].astype(jnp.float32)
    W_enc = W[Dd:, :].astype(jnp.float32)

    # Hoist the decoder-hidden projection + bias out of the kernel:
    # a single (B, Dd) @ (Dd, A) matmul for the whole batch.
    dec_proj = (decoder_hidden.astype(jnp.float32) @ W_dec
                + b.astype(jnp.float32)[None, :])                   # [B, A]

    Bt = _choose_batch_tile(B, S, De, A) if block_b is None else block_b
    n_blocks = pl.cdiv(B, Bt)
    B_pad = n_blocks * Bt

    enc = encoder_outputs.astype(jnp.float32)
    if B_pad != B:
        # Pad batch to a whole number of 8-aligned tiles; padded rows produce
        # valid (ignored) softmax rows and are sliced off below.
        enc = jnp.pad(enc, ((0, 0), (0, B_pad - B), (0, 0)))
        dec_proj = jnp.pad(dec_proj, ((0, B_pad - B), (0, 0)))

    out = pl.pallas_call(
        _attention_kernel,
        out_shape=jax.ShapeDtypeStruct((B_pad, S), jnp.float32),
        grid_spec=pltpu.PrefetchScalarGridSpec(
            num_scalar_prefetch=0,
            grid=(n_blocks,),
            in_specs=[
                # encoder outputs stay seq-first; strided DMA pulls the batch tile
                pl.BlockSpec((S, Bt, De), lambda i: (0, i, 0)),
                pl.BlockSpec((Bt, A), lambda i: (i, 0)),
                pl.BlockSpec((De, A), lambda i: (0, 0)),
            ],
            out_specs=pl.BlockSpec((Bt, S), lambda i: (i, 0)),
        ),
        compiler_params=pltpu.CompilerParams(
            dimension_semantics=("parallel",),
            vmem_limit_bytes=32 * 1024 * 1024,
        ),
    )(enc, dec_proj, W_enc)

    return out[:B] if B_pad != B else out


def attention_reference(decoder_hidden, encoder_outputs, W, b):
    """Pure-JAX reference matching the PyTorch forward exactly."""
    S = encoder_outputs.shape[0]
    rep = jnp.repeat(decoder_hidden[:, None, :], S, axis=1)           # [B, S, Dd]
    enc = jnp.transpose(encoder_outputs, (1, 0, 2))                   # [B, S, De]
    cat = jnp.concatenate([rep, enc], axis=2)                         # [B, S, Dd+De]
    energy = jnp.tanh(cat @ W + b)                                    # [B, S, A]
    att = jnp.sum(energy, axis=2)                                     # [B, S]
    return jax.nn.softmax(att, axis=1)


if __name__ == "__main__":
    # Module hyper-params (small, consistent with the forward pass).
    enc_hid_dim = 16
    dec_hid_dim = 32
    attn_dim = 32
    B, S = 2, 8
    De = 2 * enc_hid_dim
    attn_in = De + dec_hid_dim

    key = jax.random.PRNGKey(0)
    k1, k2, k3, k4 = jax.random.split(key, 4)

    # Deterministic synthetic parameters (torch Linear weight is [A, attn_in];
    # we store W pre-transposed as [attn_in, A], concat order (dec, enc)).
    bound = 1.0 / np.sqrt(attn_in)
    W = jax.random.uniform(k1, (attn_in, attn_dim), jnp.float32, -bound, bound)
    b = jax.random.uniform(k2, (attn_dim,), jnp.float32, -bound, bound)

    # Deterministic example inputs.
    decoder_hidden = jax.random.normal(k3, (B, dec_hid_dim), jnp.float32)
    encoder_outputs = jax.random.normal(k4, (S, B, De), jnp.float32)

    out = attention_forward(decoder_hidden, encoder_outputs, W, b,
                            enc_hid_dim, dec_hid_dim)
    out = jax.block_until_ready(out)

    ref = attention_reference(decoder_hidden, encoder_outputs, W, b)
    ref = jax.block_until_ready(ref)

    assert out.shape == (B, S)
    # Tolerance accounts for the EUP approximate reciprocal in the softmax
    # denominator (same as the previously verified version).
    np.testing.assert_allclose(np.asarray(out), np.asarray(ref),
                               rtol=2e-3, atol=2e-4)
    print("KERNEL_OK")
</pallas_src>

<mosaic_0001>
module attributes {stable_mosaic.version = 11 : i64} {
  func.func @_attention_kernel(%arg0: i32, %arg1: memref<8x8x32xf32, #tpu.memory_space<vmem>>, %arg2: memref<8x32xf32, #tpu.memory_space<vmem>>, %arg3: memref<32x32xf32, #tpu.memory_space<vmem>>, %arg4: memref<8x8xf32, #tpu.memory_space<vmem>>) attributes {dimension_semantics = [#tpu.dimension_semantics<parallel>], iteration_bounds = array<i64: 1>, scalar_prefetch = 0 : i64, scratch_operands = 0 : i64, tpu.core_type = #tpu.core_type<tc>, window_params = [{transform_indices = @transform_0, window_bounds = array<i64: 8, 8, 32>}, {transform_indices = @transform_1, window_bounds = array<i64: 8, 32>}, {pipeline_mode = #tpu.pipeline_mode<synchronous>, transform_indices = @transform_2, window_bounds = array<i64: 32, 32>}, {transform_indices = @transform_3, window_bounds = array<i64: 8, 8>}]} {
    %c0 = arith.constant 0 : index
    %c0_0 = arith.constant 0 : index
    %c0_1 = arith.constant 0 : index
    %0 = vector.load %arg1[%c0, %c0_0, %c0_1] : memref<8x8x32xf32, #tpu.memory_space<vmem>>, vector<8x8x32xf32>
    %1 = vector.shape_cast %0 : vector<8x8x32xf32> to vector<64x32xf32>
    %c0_2 = arith.constant 0 : index
    %c0_3 = arith.constant 0 : index
    %2 = vector.load %arg3[%c0_2, %c0_3] : memref<32x32xf32, #tpu.memory_space<vmem>>, vector<32x32xf32>
    %cst = arith.constant dense<0.000000e+00> : vector<64x32xf32>
    %3 = tpu.matmul %1, %2, %cst {dimension_numbers = #tpu.dot_dimension_numbers<[1], [0], [0], [1], [0, 0, 1, 1], [], []>} : vector<64x32xf32>, vector<32x32xf32>, vector<64x32xf32> -> vector<64x32xf32>
    %c0_4 = arith.constant 0 : index
    %c0_5 = arith.constant 0 : index
    %4 = vector.load %arg2[%c0_4, %c0_5] : memref<8x32xf32, #tpu.memory_space<vmem>>, vector<8x32xf32>
    %5 = vector.extract_strided_slice %3 {offsets = [0, 0], sizes = [8, 32], strides = [1, 1]} : vector<64x32xf32> to vector<8x32xf32>
    %6 = arith.addf %5, %4 : vector<8x32xf32>
    %7 = math.tanh %6 : vector<8x32xf32>
    %cst_6 = arith.constant dense<0.000000e+00> : vector<8xf32>
    %8 = vector.multi_reduction <add>, %7, %cst_6 [1] : vector<8x32xf32> to vector<8xf32>
    %9 = vector.shape_cast %8 : vector<8xf32> to vector<8x1xf32>
    %10 = vector.extract_strided_slice %3 {offsets = [8, 0], sizes = [8, 32], strides = [1, 1]} : vector<64x32xf32> to vector<8x32xf32>
    %11 = arith.addf %10, %4 : vector<8x32xf32>
    %12 = math.tanh %11 : vector<8x32xf32>
    %cst_7 = arith.constant dense<0.000000e+00> : vector<8xf32>
    %13 = vector.multi_reduction <add>, %12, %cst_7 [1] : vector<8x32xf32> to vector<8xf32>
    %14 = vector.shape_cast %13 : vector<8xf32> to vector<8x1xf32>
    %15 = vector.extract_strided_slice %3 {offsets = [16, 0], sizes = [8, 32], strides = [1, 1]} : vector<64x32xf32> to vector<8x32xf32>
    %16 = arith.addf %15, %4 : vector<8x32xf32>
    %17 = math.tanh %16 : vector<8x32xf32>
    %cst_8 = arith.constant dense<0.000000e+00> : vector<8xf32>
    %18 = vector.multi_reduction <add>, %17, %cst_8 [1] : vector<8x32xf32> to vector<8xf32>
    %19 = vector.shape_cast %18 : vector<8xf32> to vector<8x1xf32>
    %20 = vector.extract_strided_slice %3 {offsets = [24, 0], sizes = [8, 32], strides = [1, 1]} : vector<64x32xf32> to vector<8x32xf32>
    %21 = arith.addf %20, %4 : vector<8x32xf32>
    %22 = math.tanh %21 : vector<8x32xf32>
    %cst_9 = arith.constant dense<0.000000e+00> : vector<8xf32>
    %23 = vector.multi_reduction <add>, %22, %cst_9 [1] : vector<8x32xf32> to vector<8xf32>
    %24 = vector.shape_cast %23 : vector<8xf32> to vector<8x1xf32>
    %25 = vector.extract_strided_slice %3 {offsets = [32, 0], sizes = [8, 32], strides = [1, 1]} : vector<64x32xf32> to vector<8x32xf32>
    %26 = arith.addf %25, %4 : vector<8x32xf32>
    %27 = math.tanh %26 : vector<8x32xf32>
    %cst_10 = arith.constant dense<0.000000e+00> : vector<8xf32>
    %28 = vector.multi_reduction <add>, %27, %cst_10 [1] : vector<8x32xf32> to vector<8xf32>
    %29 = vector.shape_cast %28 : vector<8xf32> to vector<8x1xf32>
    %30 = vector.extract_strided_slice %3 {offsets = [40, 0], sizes = [8, 32], strides = [1, 1]} : vector<64x32xf32> to vector<8x32xf32>
    %31 = arith.addf %30, %4 : vector<8x32xf32>
    %32 = math.tanh %31 : vector<8x32xf32>
    %cst_11 = arith.constant dense<0.000000e+00> : vector<8xf32>
    %33 = vector.multi_reduction <add>, %32, %cst_11 [1] : vector<8x32xf32> to vector<8xf32>
    %34 = vector.shape_cast %33 : vector<8xf32> to vector<8x1xf32>
    %35 = vector.extract_strided_slice %3 {offsets = [48, 0], sizes = [8, 32], strides = [1, 1]} : vector<64x32xf32> to vector<8x32xf32>
    %36 = arith.addf %35, %4 : vector<8x32xf32>
    %37 = math.tanh %36 : vector<8x32xf32>
    %cst_12 = arith.constant dense<0.000000e+00> : vector<8xf32>
    %38 = vector.multi_reduction <add>, %37, %cst_12 [1] : vector<8x32xf32> to vector<8xf32>
    %39 = vector.shape_cast %38 : vector<8xf32> to vector<8x1xf32>
    %40 = vector.extract_strided_slice %3 {offsets = [56, 0], sizes = [8, 32], strides = [1, 1]} : vector<64x32xf32> to vector<8x32xf32>
    %41 = arith.addf %40, %4 : vector<8x32xf32>
    %42 = math.tanh %41 : vector<8x32xf32>
    %cst_13 = arith.constant dense<0.000000e+00> : vector<8xf32>
    %43 = vector.multi_reduction <add>, %42, %cst_13 [1] : vector<8x32xf32> to vector<8xf32>
    %44 = vector.shape_cast %43 : vector<8xf32> to vector<8x1xf32>
    %45 = tpu.concatenate %9, %14, %19, %24, %29, %34, %39, %44 in 1 : vector<8x1xf32>, vector<8x1xf32>, vector<8x1xf32>, vector<8x1xf32>, vector<8x1xf32>, vector<8x1xf32>, vector<8x1xf32>, vector<8x1xf32> -> vector<8x8xf32>
    %cst_14 = arith.constant dense<0xFF800000> : vector<8xf32>
    %46 = vector.multi_reduction <maximumf>, %45, %cst_14 [1] : vector<8x8xf32> to vector<8xf32>
    %47 = vector.shape_cast %46 : vector<8xf32> to vector<8x1xf32>
    %48 = vector.broadcast %47 : vector<8x1xf32> to vector<8x8xf32>
    %49 = arith.subf %45, %48 : vector<8x8xf32>
    %50 = math.exp %49 : vector<8x8xf32>
    %cst_15 = arith.constant dense<0.000000e+00> : vector<8xf32>
    %51 = vector.multi_reduction <add>, %50, %cst_15 [1] : vector<8x8xf32> to vector<8xf32>
    %52 = vector.shape_cast %51 : vector<8xf32> to vector<8x1xf32>
    %53 = tpu.reciprocal %52 {approx = true} : vector<8x1xf32> -> vector<8x1xf32>
    %54 = vector.broadcast %53 : vector<8x1xf32> to vector<8x8xf32>
    %55 = arith.mulf %50, %54 : vector<8x8xf32>
    %c0_16 = arith.constant 0 : index
    %c0_17 = arith.constant 0 : index
    %56 = vector.load %arg4[%c0_16, %c0_17] : memref<8x8xf32, #tpu.memory_space<vmem>>, vector<8x8xf32>
    tpu.vector_store %arg4[%c0_16, %c0_17], %55 {strides = array<i32>} : memref<8x8xf32, #tpu.memory_space<vmem>>, vector<8x8xf32>,
    return
  }
  func.func @transform_0(%arg0: i32) -> (i32, i32, i32) {
    %c0_i32 = arith.constant 0 : i32
    %c0_i32_0 = arith.constant 0 : i32
    %c0_i32_1 = arith.constant 0 : i32
    return %c0_i32, %arg0, %c0_i32_0 : i32, i32, i32
  }
  func.func @transform_1(%arg0: i32) -> (i32, i32) {
    %c0_i32 = arith.constant 0 : i32
    %c0_i32_0 = arith.constant 0 : i32
    return %arg0, %c0_i32 : i32, i32
  }
  func.func @transform_2(%arg0: i32) -> (i32, i32) {
    %c0_i32 = arith.constant 0 : i32
    %c0_i32_0 = arith.constant 0 : i32
    %c0_i32_1 = arith.constant 0 : i32
    return %c0_i32, %c0_i32_0 : i32, i32
  }
  func.func @transform_3(%arg0: i32) -> (i32, i32) {
    %c0_i32 = arith.constant 0 : i32
    %c0_i32_0 = arith.constant 0 : i32
    return %arg0, %c0_i32 : i32, i32
  }
}

</mosaic_0001>

<llo_original>
// kernel: tpu_custom_call.1
$region0: #{tpu_custom_call.1}
  #allocation0 [shape = 'u32[]', space=smem, size = 0x4, offset = 0x4, fixed_abs, tag = 'smem constant byte address 0x4 - core index']
  #allocation1 [shape = 'u32[144,128]{1,0:T(1,128)}', space=vmem, size = 0x12000, scoped, tag = 'internal scratch']
  %s0 = inlined_call_operand.hbm [shape: f32[8,8,32], index: 0, kind: input, shape index: {}]
  %s1 = inlined_call_operand.hbm [shape: f32[8,32], index: 1, kind: input, shape index: {}]
  %s2 = inlined_call_operand.hbm [shape: f32[32,32], index: 2, kind: input, shape index: {}]
  %s3 = inlined_call_operand.hbm [shape: f32[8,8], index: 3, kind: output, shape index: {}]
  %s4 = sld [smem:[#allocation0]]
  $region34: #{tpu_custom_call.1} parent=0
    _
  %s6 = ssub.s32 1, %s4
  %s7 = scalar_select 0, %s6, %s4
  $region1: #{tpu_custom_call.1} parent=0
    #allocation2 [shape = 'u8[32768]{0}', space=vmem, size = 0x8000, scoped, tag = 'input window, operand 0, single buffered']
    #allocation3 [shape = 's32[1]{0}', space=sflag, size = 0x4, scoped, tag = 'scoped memory for tpu_custom_call.1']
    #allocation4 [shape = 's32[1]{0}', space=sflag, size = 0x4, scoped, tag = 'scoped memory for tpu_custom_call.1']
    #allocation5 [shape = 'u8[4096]{0}', space=vmem, size = 0x1000, scoped, tag = 'input window, operand 1, single buffered']
    #allocation6 [shape = 's32[1]{0}', space=sflag, size = 0x4, scoped, tag = 'scoped memory for tpu_custom_call.1']
    #allocation7 [shape = 'u8[16384]{0}', space=vmem, size = 0x4000, scoped, tag = 'input window, operand 2, single buffered']
    #allocation8 [shape = 'u8[4096]{0}', space=vmem, size = 0x1000, scoped, tag = 'output window, operand 0, single buffered']
    %8 = vsyncpa [#allocation3], 0
    %9 = vsyncpa [#allocation6], 0
    %10 = vsyncpa [#allocation4], 0
    // Predicated region
    $region2: #{tpu_custom_call.1} parent=1 // pred_check
      _
    $region3: #{tpu_custom_call.1} parent=1 // pred_check_branch
      %12 = sbr.rel (0) target = $region5
    $region4: #{tpu_custom_call.1} parent=1 // pred_region
      %s14 = ssub.s32 1024, 1024
      %15 = vsyncadd [#allocation3], %s14
      %s16 = sshll.u32 [#allocation2], 4
      %s17 = int_to_ptr.vmem [resolvable:$true] %s16
      %22 = dma.hbm_to_vmem [thread:$0]  %s0, 1024, %s17, [#allocation3], 128, 128, 8
    $region5: #{tpu_custom_call.1} parent=1 // pred_fallthru
      _
    // Predicated region
    $region6: #{tpu_custom_call.1} parent=1 // pred_check
      _
    $region7: #{tpu_custom_call.1} parent=1 // pred_check_branch
      %24 = sbr.rel (0) target = $region9
    $region8: #{tpu_custom_call.1} parent=1 // pred_region
      %s26 = ssub.s32 128, 128
      %27 = vsyncadd [#allocation6], %s26
      %s29 = sshll.u32 [#allocation5], 4
      %s30 = int_to_ptr.vmem [resolvable:$true] %s29
      %32 = dma.hbm_to_vmem [thread:$0]  %s1, 128, %s30, [#allocation6]
    $region9: #{tpu_custom_call.1} parent=1 // pred_fallthru
      _
    // Predicated region
    $region10: #{tpu_custom_call.1} parent=1 // pred_check
      _
    $region11: #{tpu_custom_call.1} parent=1 // pred_check_branch
      %34 = sbr.rel (0) target = $region13
    $region12: #{tpu_custom_call.1} parent=1 // pred_region
      %s36 = ssub.s32 512, 512
      %37 = vsyncadd [#allocation6], %s36
      %s38 = sshll.u32 [#allocation7], 4
      %s39 = int_to_ptr.vmem [resolvable:$true] %s38
      %44 = dma.hbm_to_vmem [thread:$0]  %s2, 512, %s39, [#allocation6], 128, 128, 8
    $region13: #{tpu_custom_call.1} parent=1 // pred_fallthru
      _
    // Predicated region
    $region14: #{tpu_custom_call.1} parent=1 // pred_check
      _
    $region15: #{tpu_custom_call.1} parent=1 // pred_check_branch
      %46 = sbr.rel (0) target = $region17
    $region16: #{tpu_custom_call.1} parent=1 // pred_region
      %47 = dma.done [#allocation3], 1024
    $region17: #{tpu_custom_call.1} parent=1 // pred_fallthru
      _
    // Predicated region
    $region18: #{tpu_custom_call.1} parent=1 // pred_check
      _
    $region19: #{tpu_custom_call.1} parent=1 // pred_check_branch
      %49 = sbr.rel (0) target = $region21
    $region20: #{tpu_custom_call.1} parent=1 // pred_region
      %50 = dma.done [#allocation6], 128
    $region21: #{tpu_custom_call.1} parent=1 // pred_fallthru
      _
    // Predicated region
    $region22: #{tpu_custom_call.1} parent=1 // pred_check
      _
    $region23: #{tpu_custom_call.1} parent=1 // pred_check_branch
      %52 = sbr.rel (0) target = $region25
    $region24: #{tpu_custom_call.1} parent=1 // pred_region
      %53 = dma.done [#allocation6], 512
    $region25: #{tpu_custom_call.1} parent=1 // pred_fallthru
      _
    %v54 = vld [vmem:[#allocation2] sm:$0xff]
    %v55 = vld [vmem:[#allocation2 + $0x8] sm:$0xff]
    %v56 = vld [vmem:[#allocation2 + $0x10] sm:$0xff]
    %v57 = vld [vmem:[#allocation2 + $0x18] sm:$0xff]
    %v58 = vld [vmem:[#allocation2 + $0x20] sm:$0xff]
    %v59 = vld [vmem:[#allocation2 + $0x28] sm:$0xff]
    %v60 = vld [vmem:[#allocation2 + $0x30] sm:$0xff]
    %v61 = vld [vmem:[#allocation2 + $0x38] sm:$0xff]
    %v62 = vld [vmem:[#allocation7] sm:$0xff]
    %v63 = vld [vmem:[#allocation7 + $0x8] sm:$0xff]
    %v64 = vld [vmem:[#allocation7 + $0x10] sm:$0xff]
    %v65 = vld [vmem:[#allocation7 + $0x18] sm:$0xff]
    %vm66 = vcmask 261120
    %v68 = vsel %vm66, %v54, 0
    %v71 = vsel %vm66, %v55, 0
    %v74 = vsel %vm66, %v56, 0
    %v77 = vsel %vm66, %v57, 0
    %v80 = vsel %vm66, %v58, 0
    %v83 = vsel %vm66, %v59, 0
    %v86 = vsel %vm66, %v60, 0
    %v89 = vsel %vm66, %v61, 0
    %91 = vmatprep.subr.mxu0 0.0
    %92 = vmatpush1.msra.mxu0 0.0
    %93 = vmatprep.subr.mxu0 0.0
    %94 = vmatpush1.msra.mxu0 0.0
    %95 = vmatprep.subr.mxu0 0.0
    %96 = vmatpush1.msra.mxu0 0.0
    %97 = vmatprep.subr.mxu0 0.0
    %98 = vmatpush1.msra.mxu0 0.0
    %99 = vmatprep.subr.mxu0 0.0
    %100 = vmatpush1.msra.mxu0 0.0
    %101 = vmatprep.subr.mxu0 0.0
    %102 = vmatpush1.msra.mxu0 0.0
    %103 = vmatprep.subr.mxu0 0.0
    %104 = vmatpush1.msra.mxu0 0.0
    %105 = vmatprep.subr.mxu0 0.0
    %106 = vmatpush1.msra.mxu0 0.0
    %107 = vmatprep.subr.mxu0 0.0
    %108 = vmatpush1.msra.mxu0 0.0
    %109 = vmatprep.subr.mxu0 0.0
    %110 = vmatpush1.msra.mxu0 0.0
    %111 = vmatprep.subr.mxu0 0.0
    %112 = vmatpush1.msra.mxu0 0.0
    %113 = vmatprep.subr.mxu0 0.0
    %114 = vmatpush1.msra.mxu0 0.0
    %115 = vmatprep.subr.mxu0 0.0
    %116 = vmatpush1.msra.mxu0 %v65
    %117 = vmatprep.subr.mxu0 0.0
    %118 = vmatpush1.msra.mxu0 %v64
    %119 = vmatprep.subr.mxu0 0.0
    %120 = vmatpush1.msra.mxu0 %v63
    %121 = vmatprep.subr.mxu0 0.0
    %122 = vmatpush1.msra.mxu0 %v62
    %123 = vmatprep.subr.mxu0 0.0
    %124 = vmatpush2.msra.mxu0 0.0
    %125 = vmatprep.subr.mxu0 0.0
    %126 = vmatpush2.msra.mxu0 0.0
    %127 = vmatprep.subr.mxu0 0.0
    %128 = vmatpush2.msra.mxu0 0.0
    %129 = vmatprep.subr.mxu0 0.0
    %130 = vmatpush2.msra.mxu0 0.0
    %131 = vmatprep.subr.mxu0 0.0
    %132 = vmatpush2.msra.mxu0 0.0
    %133 = vmatprep.subr.mxu0 0.0
    %134 = vmatpush2.msra.mxu0 0.0
    %135 = vmatprep.subr.mxu0 0.0
    %136 = vmatpush2.msra.mxu0 0.0
    %137 = vmatprep.subr.mxu0 0.0
    %138 = vmatpush2.msra.mxu0 0.0
    %139 = vmatprep.subr.mxu0 0.0
    %140 = vmatpush2.msra.mxu0 0.0
    %141 = vmatprep.subr.mxu0 0.0
    %142 = vmatpush2.msra.mxu0 0.0
    %143 = vmatprep.subr.mxu0 0.0
    %144 = vmatpush2.msra.mxu0 0.0
    %145 = vmatprep.subr.mxu0 0.0
    %146 = vmatpush2.msra.mxu0 0.0
    %147 = vmatprep.subr.mxu0 0.0
    %148 = vmatpush2.msra.mxu0 0.0
    %149 = vmatprep.subr.mxu0 0.0
    %150 = vmatpush2.msra.mxu0 0.0
    %151 = vmatprep.subr.mxu0 0.0
    %152 = vmatpush2.msra.mxu0 0.0
    %153 = vmatprep.subr.mxu0 0.0
    %154 = vmatpush2.msra.mxu0 0.0
    %155 = vmatprep.mubr.f32.mxu0 0.0
    %156 = vmatmul.mubr.f32.gmra.mxu0 %v68
    %v157 = vpop.f32.mrf.mxu0
    %v158 = vadd.f32 0.0, %v157
    %v159 = vpop.f32.mrf.mxu0
    %160 = vmatprep.mubr.f32.mxu0 0.0
    %161 = vmatmul.mubr.f32.gmra.mxu0 %v71
    %v162 = vpop.f32.mrf.mxu0
    %v163 = vadd.f32 0.0, %v162
    %v164 = vpop.f32.mrf.mxu0
    %165 = vmatprep.mubr.f32.mxu0 0.0
    %166 = vmatmul.mubr.f32.gmra.mxu0 %v74
    %v167 = vpop.f32.mrf.mxu0
    %v168 = vadd.f32 0.0, %v167
    %v169 = vpop.f32.mrf.mxu0
    %170 = vmatprep.mubr.f32.mxu0 0.0
    %171 = vmatmul.mubr.f32.gmra.mxu0 %v77
    %v172 = vpop.f32.mrf.mxu0
    %v173 = vadd.f32 0.0, %v172
    %v174 = vpop.f32.mrf.mxu0
    %175 = vmatprep.mubr.f32.mxu0 0.0
    %176 = vmatmul.mubr.f32.gmra.mxu0 %v80
    %v177 = vpop.f32.mrf.mxu0
    %v178 = vadd.f32 0.0, %v177
    %v179 = vpop.f32.mrf.mxu0
    %180 = vmatprep.mubr.f32.mxu0 0.0
    %181 = vmatmul.mubr.f32.gmra.mxu0 %v83
    %v182 = vpop.f32.mrf.mxu0
    %v183 = vadd.f32 0.0, %v182
    %v184 = vpop.f32.mrf.mxu0
    %185 = vmatprep.mubr.f32.mxu0 0.0
    %186 = vmatmul.mubr.f32.gmra.mxu0 %v86
    %v187 = vpop.f32.mrf.mxu0
    %v188 = vadd.f32 0.0, %v187
    %v189 = vpop.f32.mrf.mxu0
    %190 = vmatprep.mubr.f32.mxu0 0.0
    %191 = vmatmul.mubr.f32.gmra.mxu0 %v89
    %v192 = vpop.f32.mrf.mxu0
    %v193 = vadd.f32 0.0, %v192
    %v194 = vpop.f32.mrf.mxu0
    %195 = vdwg.mxu0
    %v196 = vld [vmem:[#allocation5] sm:$0xff]
    %v197 = vadd.f32 %v158, %v196
    %v198 = vtanh.pop %v197
    %v199 = vsel %vm66, %v198, 0.0
    %200 = vadd.xlane.f32.xlu0 %v199
    %v201 = vpop.xlane.xlu0 %200
    %v202 = vadd.f32 %v163, %v196
    %v203 = vtanh.pop %v202
    %v204 = vsel %vm66, %v203, 0.0
    %205 = vadd.xlane.f32.xlu0 %v204
    %v206 = vpop.xlane.xlu0 %205
    %v207 = vadd.f32 %v168, %v196
    %v208 = vtanh.pop %v207
    %v209 = vsel %vm66, %v208, 0.0
    %210 = vadd.xlane.f32.xlu0 %v209
    %v211 = vpop.xlane.xlu0 %210
    %v212 = vadd.f32 %v173, %v196
    %v213 = vtanh.pop %v212
    %v214 = vsel %vm66, %v213, 0.0
    %215 = vadd.xlane.f32.xlu0 %v214
    %v216 = vpop.xlane.xlu0 %215
    %v217 = vadd.f32 %v178, %v196
    %v218 = vtanh.pop %v217
    %v219 = vsel %vm66, %v218, 0.0
    %220 = vadd.xlane.f32.xlu0 %v219
    %v221 = vpop.xlane.xlu0 %220
    %v222 = vadd.f32 %v183, %v196
    %v223 = vtanh.pop %v222
    %v224 = vsel %vm66, %v223, 0.0
    %225 = vadd.xlane.f32.xlu0 %v224
    %v226 = vpop.xlane.xlu0 %225
    %v227 = vadd.f32 %v188, %v196
    %v228 = vtanh.pop %v227
    %v229 = vsel %vm66, %v228, 0.0
    %230 = vadd.xlane.f32.xlu0 %v229
    %v231 = vpop.xlane.xlu0 %230
    %v232 = vadd.f32 %v193, %v196
    %v233 = vtanh.pop %v232
    %v234 = vsel %vm66, %v233, 0.0
    %235 = vadd.xlane.f32.xlu0 %v234
    %v236 = vpop.xlane.xlu0 %235
    %vm237 = vcmask 7168
    %v238 = vsel %vm237, %v201, %v206
    %vm239 = vcmask 15360
    %v240 = vsel %vm239, %v238, %v211
    %vm241 = vcmask 23552
    %v242 = vsel %vm241, %v240, %v216
    %vm243 = vcmask 31744
    %v244 = vsel %vm243, %v242, %v221
    %vm245 = vcmask 39936
    %v246 = vsel %vm245, %v244, %v226
    %vm247 = vcmask 48128
    %v248 = vsel %vm247, %v246, %v231
    %vm249 = vcmask 56320
    %v250 = vsel %vm249, %v248, %v236
    %vm251 = vcmask 64512
    %v252 = vsel %vm251, %v250, -inf
    %253 = vmax.xlane.f32.xlu0 %v252
    %v254 = vpop.xlane.xlu0 %253
    %v255 = vsub.f32 %v250, %v254
    %v256 = vmul.f32 %v255, 1.442695
    %v257 = vpow.pop %v256
    %v258 = vsel %vm251, %v257, 0.0
    %259 = vadd.xlane.f32.xlu0 %v258
    %v260 = vpop.xlane.xlu0 %259
    %v261 = vrcp.pop %v260
    %v262 = vmul.f32 %v257, %v261
    %263 = vst.msk [vmem:[#allocation8] sm:$0xff] %vm251, %v262
    // Predicated region
    $region26: #{tpu_custom_call.1} parent=1 // pred_check
      _
    $region27: #{tpu_custom_call.1} parent=1 // pred_check_branch
      %265 = sbr.rel (0) target = $region29
    $region28: #{tpu_custom_call.1} parent=1 // pred_region
      %s267 = ssub.s32 128, 128
      %268 = vsyncadd [#allocation4], %s267
      %s270 = sshll.u32 [#allocation8], 4
      %s271 = int_to_ptr.vmem [resolvable:$true] %s270
      %273 = dma.vmem_to_hbm [thread:$0]  %s271, 128, %s3, [#allocation4]
    $region29: #{tpu_custom_call.1} parent=1 // pred_fallthru
      _
    // Predicated region
    $region30: #{tpu_custom_call.1} parent=1 // pred_check
      _
    $region31: #{tpu_custom_call.1} parent=1 // pred_check_branch
      %275 = sbr.rel (0) target = $region33
    $region32: #{tpu_custom_call.1} parent=1 // pred_region
      %276 = dma.done [#allocation4], 128
    $region33: #{tpu_custom_call.1} parent=1 // pred_fallthru
      _
    %277 = vsyncpa [#allocation3], 1
    %278 = vsyncpa [#allocation6], 1
    %279 = vsyncpa [#allocation4], 1

</llo_original>
